<compile_context>
chip_gen: v5e
topology: v5e:2x2
jax: 0.10.0
libtpu: 0.0.40
codegen_flags: <defaults>
</compile_context>

<pallas_src>
import functools
import math

import jax
import jax.numpy as jnp
from jax import lax
from jax.experimental import pallas as pl
from jax.experimental.pallas import tpu as pltpu


# ---------------------------------------------------------------------------
# Kernel
# ---------------------------------------------------------------------------
def _erase_kernel(params_ref, mask_ref, x_ref, o_ref):
    """o = (mask != 0) ? 0 : x.

    params_ref : SMEM int32[7] = [flag, i, j, h, w, lo, hi]; only used by the index_maps.
    mask_ref   : VMEM (1, chunk) tile of the precomputed erase mask, in x.dtype.
    x_ref/o_ref: VMEM (bt, chunk) tiles; lane dim is a multiple of 128 (or the full H*W).
    """
    del params_ref  # consumed by the index_maps, not the body
    x = x_ref[...]
    erase = mask_ref[...] != 0  # (1, chunk) -> broadcasts over the batch sublanes
    o_ref[...] = jnp.where(erase, jnp.zeros((), x.dtype), x)


# ---------------------------------------------------------------------------
# Hardware-aware tiling helpers
# ---------------------------------------------------------------------------
def _tpu_caps():
    """(vmem_capacity_bytes, num_tensorcores) with conservative fallbacks."""
    vmem_cap = 64 << 20  # conservative default (v7x-sized VMEM)
    n_tc = 1
    get_info = getattr(pltpu, "get_tpu_info", None)
    if get_info is not None:
        try:
            vmem_cap = int(get_info().vmem_capacity_bytes)
        except Exception:
            pass
    try:
        if "v7" in jax.devices()[0].device_kind.lower():
            n_tc = 2  # v7x megacore: 2 TensorCores per chip
    except Exception:
        pass
    return vmem_cap, n_tc


def _row_chunk_rows(H, W):
    """Rows per lane-chunk: a multiple of 128 // gcd(W, 128) (so chunk lane width is a
    multiple of 128), grown toward ~1024 lanes while keeping >= 2 chunks so the row band
    can actually skip rows.  Falls back to the whole image when banding is impossible."""
    base = 128 // math.gcd(W, 128)
    if base >= H:
        return H
    rpc = base
    while rpc * 2 * W <= 1024 and rpc * 4 <= H:
        rpc *= 2
    return rpc


def _batch_tile(B, chunk_bytes, itemsize, vmem_cap, n_tc):
    """Images per grid step, rounded to the dtype sublane tile (or full B)."""
    sub = max(8, 32 // itemsize)  # 8 for f32, 16 for bf16, 32 for int8
    if B <= sub:
        return B  # full-extent block dim: always a legal BlockSpec
    target = min(8 << 20, max(vmem_cap // 16, 1 << 20))  # ~8 MiB v5e/v6e, ~4 MiB v7x
    bt = min(B, max(1, target // max(chunk_bytes, 1)))
    bt = max(sub, (bt // sub) * sub)
    if n_tc >= 2 and bt >= B:
        # v7x only: keep >= 2 steps on the 'parallel' batch axis so megacore can shard it.
        bt = min(bt, max(sub, (((B + 1) // 2) // sub) * sub))
    return min(bt, B)


# ---------------------------------------------------------------------------
# pallas_call wrapper
# ---------------------------------------------------------------------------
def _erase_pallas(x_flat, mask, params, *, img_w, rows_per_chunk):
    """x_flat: [B, H*W]; mask: [1, H*W] (x.dtype); params: int32[7]=[flag,i,j,h,w,lo,hi]."""
    B, HW = x_flat.shape
    H = HW // img_w
    itemsize = x_flat.dtype.itemsize
    chunk = rows_per_chunk * img_w  # multiple of 128, or the full H*W
    nr = pl.cdiv(H, rows_per_chunk)

    vmem_cap, n_tc = _tpu_caps()
    bt = _batch_tile(B, chunk * itemsize, itemsize, vmem_cap, n_tc)
    nb = pl.cdiv(B, bt)

    # double-buffered x in + out + mask, plus headroom; capped at half the physical VMEM
    # (<=32 MiB on v7x, <=64 MiB on v5e/v6e).
    need = 4 * bt * chunk * itemsize + 4 * chunk * itemsize + (2 << 20)
    vmem_limit = int(min(max(need, 16 << 20), max(16 << 20, vmem_cap // 2)))

    def _band(r, pr):
        # clamp the row-chunk grid index into the erased band [lo, hi]
        return jnp.minimum(jnp.maximum(r, pr[5]), pr[6])

    x_map = lambda b, r, pr: (b, _band(r, pr))
    m_map = lambda b, r, pr: (0, _band(r, pr))

    return pl.pallas_call(
        _erase_kernel,
        out_shape=jax.ShapeDtypeStruct((B, HW), x_flat.dtype),
        grid_spec=pltpu.PrefetchScalarGridSpec(
            num_scalar_prefetch=1,
            grid=(nb, nr),
            in_specs=[
                pl.BlockSpec((1, chunk), m_map),    # precomputed mask band (x.dtype)
                pl.BlockSpec((bt, chunk), x_map),   # image band
            ],
            out_specs=pl.BlockSpec((bt, chunk), x_map),
        ),
        # inplace=True: alias ddx's buffer to the output.  Flat input order:
        # 0 = params (scalar prefetch), 1 = mask, 2 = x_flat.  Required for correctness of
        # the row-band streaming: out-of-band blocks are never written, so they must
        # already hold the input values in HBM.
        input_output_aliases={2: 0},
        compiler_params=pltpu.CompilerParams(
            dimension_semantics=("parallel", "arbitrary"),
            vmem_limit_bytes=vmem_limit,
        ),
    )(params, mask, x_flat)


# ---------------------------------------------------------------------------
# On-device parameter sampling (jit-able, no host syncs)
# ---------------------------------------------------------------------------
def _sample_erase_params(key, H, W, p, scale, ratio):
    """Device-side replication of torchvision RandomErasing.get_params (10 vectorized
    attempts + first-valid selection).  Returns int32[5] = [flag, i, j, h, w]; all zero
    when no erase applies.
    # TODO(synk): torch's RNG bitstream cannot be reproduced exactly; jax.random with the
    # same 10-attempt rejection logic is used instead.
    """
    k_p, k_area, k_ratio, k_i, k_j = jax.random.split(key, 5)
    area = float(H * W)
    log_r0, log_r1 = math.log(ratio[0]), math.log(ratio[1])

    do_erase = jax.random.uniform(k_p) < p

    erase_area = area * jax.random.uniform(k_area, (10,), minval=scale[0], maxval=scale[1])
    aspect = jnp.exp(jax.random.uniform(k_ratio, (10,), minval=log_r0, maxval=log_r1))
    h_all = jnp.round(jnp.sqrt(erase_area * aspect)).astype(jnp.int32)
    w_all = jnp.round(jnp.sqrt(erase_area / aspect)).astype(jnp.int32)

    valid = (h_all < H) & (w_all < W)  # torchvision acceptance check
    any_valid = jnp.any(valid)
    idx = jnp.argmax(valid)            # first valid attempt
    h = h_all[idx]
    w = w_all[idx]

    # randint with traced upper bound: floor(uniform * range), clamped for f32 edge cases.
    i = (jax.random.uniform(k_i) * (H - h + 1).astype(jnp.float32)).astype(jnp.int32)
    j = (jax.random.uniform(k_j) * (W - w + 1).astype(jnp.float32)).astype(jnp.int32)
    i = jnp.minimum(i, H - h)
    j = jnp.minimum(j, W - w)

    flag = (do_erase & any_valid & (h > 0) & (w > 0)).astype(jnp.int32)
    return jnp.stack([flag, i, j, h, w]).astype(jnp.int32) * flag


# ---------------------------------------------------------------------------
# Forward (mirrors ErasingAugmentation.forward)
# ---------------------------------------------------------------------------
def erasing_augmentation_forward(
    ddx,
    mdx,
    p,
    props=None,
    *,
    key,
    erase_p=0.5,
    scale=(0.02, 0.33),
    ratio=(0.3, 3.3),
    value=0,
):
    """ddx.unsqueeze(-3) -> RandomErasing(inplace=True) -> .squeeze(); mdx, p (and props)
    pass through.  The C=1 channel dim is a compute no-op, so the kernel runs on the
    lane-dense flattened [B, H*W] view.  Fully jit-able."""
    assert value == 0, "module __init__ default value=0 is implemented"
    orig_shape = ddx.shape
    H, W = orig_shape[-2], orig_shape[-1]
    HW = H * W

    x_flat = ddx.reshape((-1, HW))  # contiguous, free reshape; lane-dense layout
    rpc = _row_chunk_rows(H, W)

    base = _sample_erase_params(key, H, W, erase_p, scale, ratio)  # [flag, i, j, h, w]
    lo = base[1] // rpc
    hi = jnp.maximum((base[1] + jnp.maximum(base[3], 1) - 1) // rpc, lo)
    params = jnp.concatenate([base, jnp.stack([lo, hi])]).astype(jnp.int32)

    def _erase_branch(xx, pr):
        i, j, h, w = pr[1], pr[2], pr[3], pr[4]
        rows = lax.broadcasted_iota(jnp.int32, (H, W), 0)
        cols = lax.broadcasted_iota(jnp.int32, (H, W), 1)
        er = (rows >= i) & (rows < i + h) & (cols >= j) & (cols < j + w)
        mask = er.astype(xx.dtype).reshape(1, HW)  # O(HW) one-off, outside the kernel
        return _erase_pallas(xx, mask, pr, img_w=W, rows_per_chunk=rpc)

    erased_flat = lax.cond(
        params[0] > 0,
        _erase_branch,
        lambda xx, pr: xx,  # no erase: skip the kernel entirely (zero HBM traffic)
        x_flat,
        params,
    )

    # torch .squeeze(): drops ALL size-1 dims (so a B==1 batch dim disappears, as in torch)
    ddx_out = jnp.squeeze(erased_flat.reshape(orig_shape))

    if props is not None:
        return (ddx_out, mdx, p, props)
    return (ddx_out, mdx, p)


# ---------------------------------------------------------------------------
# Self-test
# ---------------------------------------------------------------------------
if __name__ == "__main__":
    key = jax.random.PRNGKey(0)
    k_data, k_mask, k_aug = jax.random.split(key, 3)

    B, H, W = 2, 16, 16
    ddx = jax.random.normal(k_data, (B, H, W), dtype=jnp.float32)
    mdx = jax.random.normal(k_mask, (B, H, W), dtype=jnp.float32)
    p = jnp.float32(0.7)

    # erase_p=1.0 so the Pallas (erase) path is exercised deterministically.
    fwd = jax.jit(functools.partial(erasing_augmentation_forward, erase_p=1.0))
    out_ddx, out_mdx, out_p = fwd(ddx, mdx, p, key=k_aug)
    jax.block_until_ready(out_ddx)
    jax.block_until_ready(out_mdx)

    assert out_ddx.shape == (B, H, W)
    assert out_ddx.dtype == ddx.dtype

    # exact reference built from the same on-device parameter sampling
    prm = _sample_erase_params(k_aug, H, W, 1.0, (0.02, 0.33), (0.3, 3.3))
    flag, ei, ej, eh, ew = (int(v) for v in prm)
    rows = jnp.arange(H)[:, None]
    cols = jnp.arange(W)[None, :]
    rect = (rows >= ei) & (rows < ei + eh) & (cols >= ej) & (cols < ej + ew)
    if flag:
        expected = jnp.where(rect[None], jnp.zeros((), ddx.dtype), ddx)
    else:
        expected = ddx
    assert bool(jnp.array_equal(out_ddx, expected))

    # pass-through args are untouched
    assert bool(jnp.all(out_mdx == mdx))
    assert float(out_p) == float(p)

    # no-erase path (probability 0) returns the input unchanged
    fwd0 = jax.jit(functools.partial(erasing_augmentation_forward, erase_p=0.0))
    out0 = fwd0(ddx, mdx, p, key=k_aug)[0]
    jax.block_until_ready(out0)
    assert bool(jnp.array_equal(out0, ddx))

    print("KERNEL_OK")
</pallas_src>

<mosaic_0001>
module attributes {stable_mosaic.version = 11 : i64} {
  func.func @_erase_kernel(%arg0: i32, %arg1: i32, %arg2: memref<7xi32, #tpu.memory_space<smem>>, %arg3: memref<1x128xf32, #tpu.memory_space<vmem>>, %arg4: memref<2x128xf32, #tpu.memory_space<vmem>>, %arg5: memref<2x128xf32, #tpu.memory_space<vmem>>) attributes {dimension_semantics = [#tpu.dimension_semantics<parallel>, #tpu.dimension_semantics<arbitrary>], iteration_bounds = array<i64: 1, 2>, scalar_prefetch = 1 : i64, scratch_operands = 0 : i64, tpu.core_type = #tpu.core_type<tc>, window_params = [{transform_indices = @transform_0, window_bounds = array<i64: 1, 128>}, {transform_indices = @transform_1, window_bounds = array<i64: 2, 128>}, {transform_indices = @transform_2, window_bounds = array<i64: 2, 128>}]} {
    %c0 = arith.constant 0 : index
    %c0_0 = arith.constant 0 : index
    %0 = vector.load %arg4[%c0, %c0_0] : memref<2x128xf32, #tpu.memory_space<vmem>>, vector<2x128xf32>
    %c0_1 = arith.constant 0 : index
    %c0_2 = arith.constant 0 : index
    %1 = vector.load %arg3[%c0_1, %c0_2] : memref<1x128xf32, #tpu.memory_space<vmem>>, vector<1x128xf32>
    %cst = arith.constant 0.000000e+00 : f32
    %2 = vector.broadcast %cst : f32 to vector<1x128xf32>
    %3 = arith.cmpf one, %1, %2 : vector<1x128xf32>
    %cst_3 = arith.constant 0.000000e+00 : f32
    %4 = vector.shape_cast %3 : vector<1x128xi1> to vector<1x128xi1>
    %5 = vector.broadcast %4 : vector<1x128xi1> to vector<2x128xi1>
    %6 = vector.broadcast %cst_3 : f32 to vector<2x128xf32>
    %7 = arith.select %5, %6, %0 : vector<2x128xi1>, vector<2x128xf32>
    %c0_4 = arith.constant 0 : index
    %c0_5 = arith.constant 0 : index
    %8 = vector.load %arg5[%c0_4, %c0_5] : memref<2x128xf32, #tpu.memory_space<vmem>>, vector<2x128xf32>
    tpu.vector_store %arg5[%c0_4, %c0_5], %7 {strides = array<i32>} : memref<2x128xf32, #tpu.memory_space<vmem>>, vector<2x128xf32>,
    return
  }
  func.func @transform_0(%arg0: i32, %arg1: i32, %arg2: memref<7xi32, #tpu.memory_space<smem>>) -> (i32, i32) {
    %c5 = arith.constant 5 : index
    %0 = memref.load %arg2[%c5] : memref<7xi32, #tpu.memory_space<smem>>
    %1 = arith.maxsi %arg1, %0 : i32
    %c6 = arith.constant 6 : index
    %2 = memref.load %arg2[%c6] : memref<7xi32, #tpu.memory_space<smem>>
    %3 = arith.minsi %1, %2 : i32
    %c0_i32 = arith.constant 0 : i32
    %c0_i32_0 = arith.constant 0 : i32
    return %c0_i32, %3 : i32, i32
  }
  func.func @transform_1(%arg0: i32, %arg1: i32, %arg2: memref<7xi32, #tpu.memory_space<smem>>) -> (i32, i32) {
    %c5 = arith.constant 5 : index
    %0 = memref.load %arg2[%c5] : memref<7xi32, #tpu.memory_space<smem>>
    %1 = arith.maxsi %arg1, %0 : i32
    %c6 = arith.constant 6 : index
    %2 = memref.load %arg2[%c6] : memref<7xi32, #tpu.memory_space<smem>>
    %3 = arith.minsi %1, %2 : i32
    %c0_i32 = arith.constant 0 : i32
    return %arg0, %3 : i32, i32
  }
  func.func @transform_2(%arg0: i32, %arg1: i32, %arg2: memref<7xi32, #tpu.memory_space<smem>>) -> (i32, i32) {
    %c5 = arith.constant 5 : index
    %0 = memref.load %arg2[%c5] : memref<7xi32, #tpu.memory_space<smem>>
    %1 = arith.maxsi %arg1, %0 : i32
    %c6 = arith.constant 6 : index
    %2 = memref.load %arg2[%c6] : memref<7xi32, #tpu.memory_space<smem>>
    %3 = arith.minsi %1, %2 : i32
    %c0_i32 = arith.constant 0 : i32
    return %arg0, %3 : i32, i32
  }
}

</mosaic_0001>

<llo_original>
// kernel: branch_1_fun.1
$region0: #{branch_1_fun.1}
  #allocation0 [shape = 'u32[]', space=smem, size = 0x4, offset = 0x4, fixed_abs, tag = 'smem constant byte address 0x4 - core index']
  #allocation1 [shape = 'u32[72,128]{1,0:T(1,128)}', space=vmem, size = 0x9000, scoped, tag = 'internal scratch']
  #allocation2 [shape = 's32[1]{0}', space=sflag, size = 0x4, scoped, tag = 'scoped memory for branch_1_fun.1']
  #allocation3 [shape = 'u8[512]{0}', space=smem, size = 0x200, scoped, tag = 'prefetched SMEM operand 0']
  %s0 = inlined_call_operand.vmem [shape: s32[7], index: 0, kind: input, shape index: {}]
  %s1 = inlined_call_operand.vmem [shape: f32[1,256], index: 1, kind: input, shape index: {}]
  %s2 = inlined_call_operand.vmem [shape: f32[2,256], index: 2, kind: input, shape index: {}, may-alias: {2,3}]
  %s3 = inlined_call_operand.vmem [shape: f32[2,256], index: 3, kind: output, shape index: {}, may-alias: {2,3}]
  %s4 = sld [smem:[#allocation0]]
  $region41: #{branch_1_fun.1} parent=0
    _
  %s6 = ssub.s32 1, %s4
  %s7 = scalar_select 0, %s6, %s4
  %s9 = sshll.u32 %s0, 4
  %s10 = int_to_ptr.vmem [resolvable:$true] %s9
  %12 = dma.vmem_to_smem %s10, 16, [#allocation3], [#allocation2]
  %14 = dma.done [#allocation2], 16
  %15 = sfence
  loop: start=0, step=1, limit=4
  $region2: #{branch_1_fun.1} parent=0 // loop_pre_header
    _
  $region3: #{branch_1_fun.1} parent=0 // loop_header
    %s17 = sphi 0, %s21
    %p18 = scmp.ge.s32.totalorder %s17, 4
    %s24 = sphi 0, %s36
    %s25 = sphi 0, %s32
    %s26 = sphi 0, %s24
    %s27 = sphi 0, %s25
    %s28 = sphi 0, %s26
    %s29 = sphi 0, %s27
    %s51 = sphi 0, %s53
    %s54 = sphi 0, %s51
    %s55 = sphi 0, %s54
    %s71 = sphi 0, %s55
    %s91 = sphi 0, %s93
    %s94 = sphi 0, %s91
    %s95 = sphi 0, %s94
    %s111 = sphi 0, %s95
    %s131 = sphi 0, %s133
    %s134 = sphi 0, %s131
    %s135 = sphi 0, %s134
    %s151 = sphi 0, %s135
  $region4: #{branch_1_fun.1} parent=0 // loop_header_branch
    %20 = sbr.rel (%p18) target = $region8
  $region5: #{branch_1_fun.1} parent=0 // loop_body
    %s22 = ssub.s32 %s17, 1
    %s23 = ssub.s32 %s17, 2
    %s30 = sadd.s32 1, %s25
    %p31 = scmp.ge.s32.totalorder %s30, 2
    %s32 = scalar_select %p31, 0, %s30
    %s33 = sadd.s32 1, %s24
    %s34 = scalar_select %p31, %s33, %s24
    %p35 = scmp.ge.s32.totalorder %s34, 1
    %s36 = scalar_select %p35, 0, %s34
    %s37 = sld [smem:[#allocation3 + $0x5]]
    %p38 = scmp.gt.s32.totalorder %s25, %s37
    %s39 = scalar_select %p38, %s25, %s37
    %s40 = sld [smem:[#allocation3 + $0x6]]
    %p41 = scmp.lt.s32.totalorder %s39, %s40
    %s42 = scalar_select %p41, %s39, %s40
    %s43 = sld [smem:[#allocation3 + $0x5]]
    %p44 = scmp.gt.s32.totalorder %s32, %s43
    %s45 = scalar_select %p44, %s32, %s43
    %s46 = sld [smem:[#allocation3 + $0x6]]
    %p47 = scmp.lt.s32.totalorder %s45, %s46
    %s48 = scalar_select %p47, %s45, %s46
    %s49 = ssub.s32 %s42, %s48
    %p50 = scmp.eq.s32.totalorder %s49, 0
    %s52 = sadd.s32 %s51, 1
    %s53 = scalar_select %p50, %s51, %s52
    %p56 = pneg %p50
    %p57 = scmp.eq.s32.totalorder %s17, 1
    %p58 = por %p56, %p57
    %p59 = scmp.ne.s32.totalorder %s51, %s54
    %p60 = scmp.eq.s32.totalorder %s17, 0
    %p61 = por %p59, %p60
    %p62 = scmp.ne.s32.totalorder %s51, %s54
    %p63 = scmp.eq.s32.totalorder %s22, 1
    %p64 = por %p62, %p63
    %p65 = scmp.ne.s32.totalorder %s54, %s55
    %p66 = scmp.eq.s32.totalorder %s22, 0
    %p67 = por %p65, %p66
    %p68 = scmp.ne.s32.totalorder %s54, %s55
    %p69 = scmp.eq.s32.totalorder %s23, 1
    %p70 = por %p68, %p69
    %p72 = scmp.ne.s32.totalorder %s55, %s71
    %p73 = scmp.eq.s32.totalorder %s23, 0
    %p74 = por %p72, %p73
    %s75 = sld [smem:[#allocation3 + $0x5]]
    %p76 = scmp.gt.s32.totalorder %s25, %s75
    %s77 = scalar_select %p76, %s25, %s75
    %s78 = sld [smem:[#allocation3 + $0x6]]
    %p79 = scmp.lt.s32.totalorder %s77, %s78
    %s80 = scalar_select %p79, %s77, %s78
    %s81 = sld [smem:[#allocation3 + $0x5]]
    %p82 = scmp.gt.s32.totalorder %s32, %s81
    %s83 = scalar_select %p82, %s32, %s81
    %s84 = sld [smem:[#allocation3 + $0x6]]
    %p85 = scmp.lt.s32.totalorder %s83, %s84
    %s86 = scalar_select %p85, %s83, %s84
    %s87 = ssub.s32 %s24, %s36
    %s88 = ssub.s32 %s80, %s86
    %s89 = sor.u32 %s87, %s88
    %p90 = scmp.eq.s32.totalorder %s89, 0
    %s92 = sadd.s32 %s91, 1
    %s93 = scalar_select %p90, %s91, %s92
    %p96 = pneg %p90
    %p97 = scmp.eq.s32.totalorder %s17, 1
    %p98 = por %p96, %p97
    %p99 = scmp.ne.s32.totalorder %s91, %s94
    %p100 = scmp.eq.s32.totalorder %s17, 0
    %p101 = por %p99, %p100
    %p102 = scmp.ne.s32.totalorder %s91, %s94
    %p103 = scmp.eq.s32.totalorder %s22, 1
    %p104 = por %p102, %p103
    %p105 = scmp.ne.s32.totalorder %s94, %s95
    %p106 = scmp.eq.s32.totalorder %s22, 0
    %p107 = por %p105, %p106
    %p108 = scmp.ne.s32.totalorder %s94, %s95
    %p109 = scmp.eq.s32.totalorder %s23, 1
    %p110 = por %p108, %p109
    %p112 = scmp.ne.s32.totalorder %s95, %s111
    %p113 = scmp.eq.s32.totalorder %s23, 0
    %p114 = por %p112, %p113
    %s115 = sld [smem:[#allocation3 + $0x5]]
    %p116 = scmp.gt.s32.totalorder %s25, %s115
    %s117 = scalar_select %p116, %s25, %s115
    %s118 = sld [smem:[#allocation3 + $0x6]]
    %p119 = scmp.lt.s32.totalorder %s117, %s118
    %s120 = scalar_select %p119, %s117, %s118
    %s121 = sld [smem:[#allocation3 + $0x5]]
    %p122 = scmp.gt.s32.totalorder %s32, %s121
    %s123 = scalar_select %p122, %s32, %s121
    %s124 = sld [smem:[#allocation3 + $0x6]]
    %p125 = scmp.lt.s32.totalorder %s123, %s124
    %s126 = scalar_select %p125, %s123, %s124
    %s127 = ssub.s32 %s24, %s36
    %s128 = ssub.s32 %s120, %s126
    %s129 = sor.u32 %s127, %s128
    %p130 = scmp.eq.s32.totalorder %s129, 0
    %s132 = sadd.s32 %s131, 1
    %s133 = scalar_select %p130, %s131, %s132
    %p136 = pneg %p130
    %p137 = scmp.eq.s32.totalorder %s17, 1
    %p138 = por %p136, %p137
    %p139 = scmp.ne.s32.totalorder %s131, %s134
    %p140 = scmp.eq.s32.totalorder %s17, 0
    %p141 = por %p139, %p140
    %p142 = scmp.ne.s32.totalorder %s131, %s134
    %p143 = scmp.eq.s32.totalorder %s22, 1
    %p144 = por %p142, %p143
    %p145 = scmp.ne.s32.totalorder %s134, %s135
    %p146 = scmp.eq.s32.totalorder %s22, 0
    %p147 = por %p145, %p146
    %p148 = scmp.ne.s32.totalorder %s134, %s135
    %p149 = scmp.eq.s32.totalorder %s23, 1
    %p150 = por %p148, %p149
    %p152 = scmp.ne.s32.totalorder %s135, %s151
    %p153 = scmp.eq.s32.totalorder %s23, 0
    %p154 = por %p152, %p153
    %p155 = scmp.le.s32.totalorder 1, %s17
    %p156 = scmp.lt.s32.totalorder %s17, 3
    %p157 = pnand %p155, %p156
    %p158 = pneg %p157
    // Predicated region
    $region9: #{branch_1_fun.1} parent=5 // pred_check
      _
    $region10: #{branch_1_fun.1} parent=5 // pred_check_branch
      %160 = sbr.rel (%p157) target = $region12
    $region11: #{branch_1_fun.1} parent=5 // pred_region
      %s161 = ssub.s32 %s17, 1
    $region12: #{branch_1_fun.1} parent=5 // pred_fallthru
      _
    %p162 = scmp.lt.s32.totalorder %s17, 2
    // Predicated region
    $region13: #{branch_1_fun.1} parent=5 // pred_check
      %p163 = pneg %p162
    $region14: #{branch_1_fun.1} parent=5 // pred_check_branch
      %165 = sbr.rel (%p163) target = $region16
    $region15: #{branch_1_fun.1} parent=5 // pred_region
      // Predicated region
      $region17: #{branch_1_fun.1} parent=15 // pred_check
        %p166 = pneg %p61
      $region18: #{branch_1_fun.1} parent=15 // pred_check_branch
        %168 = sbr.rel (%p166) target = $region20
      $region19: #{branch_1_fun.1} parent=15 // pred_region
        %s169 = sld [smem:[#allocation3 + $0x5]]
        %p170 = scmp.gt.s32.totalorder %s25, %s169
        %s171 = scalar_select %p170, %s25, %s169
        %s172 = sld [smem:[#allocation3 + $0x6]]
        %p173 = scmp.lt.s32.totalorder %s171, %s172
        %s174 = scalar_select %p173, %s171, %s172
        %p175 = scmp.lt.s32.totalorder %s174, 1
        %s176 = scalar_select %p175, %s174, 1
        %s177 = scalar_lea.vmem %s1, %s176
        %s178 = sld [smem:[#allocation3 + $0x5]]
        %p179 = scmp.gt.s32.totalorder %s25, %s178
        %s180 = scalar_select %p179, %s25, %s178
        %s181 = sld [smem:[#allocation3 + $0x6]]
        %p182 = scmp.lt.s32.totalorder %s180, %s181
        %s183 = scalar_select %p182, %s180, %s181
      $region20: #{branch_1_fun.1} parent=15 // pred_fallthru
        _
      // Predicated region
      $region21: #{branch_1_fun.1} parent=15 // pred_check
        %p184 = pneg %p101
      $region22: #{branch_1_fun.1} parent=15 // pred_check_branch
        %186 = sbr.rel (%p184) target = $region24
      $region23: #{branch_1_fun.1} parent=15 // pred_region
        %s187 = sld [smem:[#allocation3 + $0x5]]
        %p188 = scmp.gt.s32.totalorder %s25, %s187
        %s189 = scalar_select %p188, %s25, %s187
        %s190 = sld [smem:[#allocation3 + $0x6]]
        %p191 = scmp.lt.s32.totalorder %s189, %s190
        %s192 = scalar_select %p191, %s189, %s190
        %p193 = scmp.lt.s32.totalorder %s24, 0
        %s194 = scalar_select %p193, %s24, 0
        %p195 = scmp.lt.s32.totalorder %s192, 1
        %s196 = scalar_select %p195, %s192, 1
        %s197 = smul.addr %s194, 2
        %s198 = sadd.s32 %s196, %s197
        %s199 = smul.addr %s198, 2
        %s200 = scalar_lea.vmem %s2, %s199
        %s201 = sld [smem:[#allocation3 + $0x5]]
        %p202 = scmp.gt.s32.totalorder %s25, %s201
        %s203 = scalar_select %p202, %s25, %s201
        %s204 = sld [smem:[#allocation3 + $0x6]]
        %p205 = scmp.lt.s32.totalorder %s203, %s204
        %s206 = scalar_select %p205, %s203, %s204
      $region24: #{branch_1_fun.1} parent=15 // pred_fallthru
        _
    $region16: #{branch_1_fun.1} parent=5 // pred_fallthru
      _
    %p207 = scmp.le.s32.totalorder 1, %s17
    %p208 = scmp.lt.s32.totalorder %s17, 3
    %p209 = pnand %p207, %p208
    %p210 = pneg %p209
    // Predicated region
    $region25: #{branch_1_fun.1} parent=5 // pred_check
      _
    $region26: #{branch_1_fun.1} parent=5 // pred_check_branch
      %212 = sbr.rel (%p209) target = $region28
    $region27: #{branch_1_fun.1} parent=5 // pred_region
      %s213 = ssub.s32 %s17, 1
      %s214 = sld [smem:[#allocation3 + $0x5]]
      %p215 = scmp.gt.s32.totalorder %s27, %s214
      %s216 = scalar_select %p215, %s27, %s214
      %s217 = sld [smem:[#allocation3 + $0x6]]
      %p218 = scmp.lt.s32.totalorder %s216, %s217
      %s219 = scalar_select %p218, %s216, %s217
      %p220 = scmp.lt.s32.totalorder %s219, 1
      %s221 = scalar_select %p220, %s219, 1
      %s222 = scalar_lea.vmem %s1, %s221
      %p223 = pneg %p67
      %p224 = pneg %p64
      %s225 = sld [smem:[#allocation3 + $0x5]]
      %p226 = scmp.gt.s32.totalorder %s27, %s225
      %s227 = scalar_select %p226, %s27, %s225
      %s228 = sld [smem:[#allocation3 + $0x6]]
      %p229 = scmp.lt.s32.totalorder %s227, %s228
      %s230 = scalar_select %p229, %s227, %s228
      %p231 = scmp.lt.s32.totalorder %s26, 0
      %s232 = scalar_select %p231, %s26, 0
      %p233 = scmp.lt.s32.totalorder %s230, 1
      %s234 = scalar_select %p233, %s230, 1
      %s235 = smul.addr %s232, 2
      %s236 = sadd.s32 %s234, %s235
      %s237 = smul.addr %s236, 2
      %s238 = scalar_lea.vmem %s2, %s237
      %p239 = pneg %p107
      %p240 = pneg %p104
      %p241 = pneg %p147
      %p242 = pneg %p144
      %s243 = sld [smem:[#allocation3 + $0x5]]
      %p244 = scmp.gt.s32.totalorder %s27, %s243
      %s245 = scalar_select %p244, %s27, %s243
      %s246 = sld [smem:[#allocation3 + $0x6]]
      %p247 = scmp.lt.s32.totalorder %s245, %s246
      %s248 = scalar_select %p247, %s245, %s246
      %p249 = scmp.lt.s32.totalorder %s26, 0
      %s250 = scalar_select %p249, %s26, 0
      %p251 = scmp.lt.s32.totalorder %s248, 1
      %s252 = scalar_select %p251, %s248, 1
      %s253 = smul.addr %s250, 2
      %s254 = sadd.s32 %s252, %s253
      %s255 = smul.addr %s254, 2
      %s256 = scalar_lea.vmem %s3, %s255
      %s257 = sld [smem:[#allocation3 + $0x5]]
      %p258 = scmp.gt.s32.totalorder %s27, %s257
      %s259 = scalar_select %p258, %s27, %s257
      %s260 = sld [smem:[#allocation3 + $0x6]]
      %p261 = scmp.lt.s32.totalorder %s259, %s260
      %s262 = scalar_select %p261, %s259, %s260
      %p263 = scmp.lt.s32.totalorder %s262, 1
      %s264 = scalar_select %p263, %s262, 1
      %s265 = scalar_lea.vmem %s1, %s264
      %s266 = sld [smem:[#allocation3 + $0x5]]
      %p267 = scmp.gt.s32.totalorder %s27, %s266
      %s268 = scalar_select %p267, %s27, %s266
      %s269 = sld [smem:[#allocation3 + $0x6]]
      %p270 = scmp.lt.s32.totalorder %s268, %s269
      %s271 = scalar_select %p270, %s268, %s269
      %s272 = sld [smem:[#allocation3 + $0x5]]
      %p273 = scmp.gt.s32.totalorder %s27, %s272
      %s274 = scalar_select %p273, %s27, %s272
      %s275 = sld [smem:[#allocation3 + $0x6]]
      %p276 = scmp.lt.s32.totalorder %s274, %s275
      %s277 = scalar_select %p276, %s274, %s275
      %p278 = scmp.lt.s32.totalorder %s26, 0
      %s279 = scalar_select %p278, %s26, 0
      %p280 = scmp.lt.s32.totalorder %s277, 1
      %s281 = scalar_select %p280, %s277, 1
      %s282 = smul.addr %s279, 2
      %s283 = sadd.s32 %s281, %s282
      %s284 = smul.addr %s283, 2
      %s285 = scalar_lea.vmem %s2, %s284
      %s286 = sld [smem:[#allocation3 + $0x5]]
      %p287 = scmp.gt.s32.totalorder %s27, %s286
      %s288 = scalar_select %p287, %s27, %s286
      %s289 = sld [smem:[#allocation3 + $0x6]]
      %p290 = scmp.lt.s32.totalorder %s288, %s289
      %s291 = scalar_select %p290, %s288, %s289
      %s292 = sld [smem:[#allocation3 + $0x5]]
      %p293 = scmp.gt.s32.totalorder %s27, %s292
      %s294 = scalar_select %p293, %s27, %s292
      %s295 = sld [smem:[#allocation3 + $0x6]]
      %p296 = scmp.lt.s32.totalorder %s294, %s295
      %s297 = scalar_select %p296, %s294, %s295
      %p298 = scmp.lt.s32.totalorder %s26, 0
      %s299 = scalar_select %p298, %s26, 0
      %p300 = scmp.lt.s32.totalorder %s297, 1
      %s301 = scalar_select %p300, %s297, 1
      %s302 = smul.addr %s299, 2
      %s303 = sadd.s32 %s301, %s302
      %s304 = smul.addr %s303, 2
      %s305 = scalar_lea.vmem %s3, %s304
      %s306 = sld [smem:[#allocation3 + $0x5]]
      %p307 = scmp.gt.s32.totalorder %s27, %s306
      %s308 = scalar_select %p307, %s27, %s306
      %s309 = sld [smem:[#allocation3 + $0x6]]
      %p310 = scmp.lt.s32.totalorder %s308, %s309
      %s311 = scalar_select %p310, %s308, %s309
      %v312 = vld [vmem:[%s285] sm:$0x3]
      %v313 = vld [vmem:[%s265] sm:$0x1]
      %vm314 = vcmp.ne.f32.partialorder %v313, 0.0
      %v315 = vsel %vm314, 1, 0
      %v316 = vperm.slane %v315, 0
      %vm317 = vcmp.eq.s32.totalorder %v316, 1
      %v318 = vsel %vm317, 0.0, %v312
      %319 = vst [vmem:[%s305] sm:$0x3] %v318
      %s320 = sld [smem:[#allocation3 + $0x5]]
      %p321 = scmp.gt.s32.totalorder %s27, %s320
      %s322 = scalar_select %p321, %s27, %s320
      %s323 = sld [smem:[#allocation3 + $0x6]]
      %p324 = scmp.lt.s32.totalorder %s322, %s323
      %s325 = scalar_select %p324, %s322, %s323
      %p326 = scmp.lt.s32.totalorder %s26, 0
      %s327 = scalar_select %p326, %s26, 0
      %p328 = scmp.lt.s32.totalorder %s325, 1
      %s329 = scalar_select %p328, %s325, 1
      %s330 = smul.addr %s327, 2
      %s331 = sadd.s32 %s329, %s330
      %s332 = smul.addr %s331, 2
      %s333 = scalar_lea.vmem %s3, %s332
      // Predicated region
      $region29: #{branch_1_fun.1} parent=27 // pred_check
        %p334 = pneg %p144
      $region30: #{branch_1_fun.1} parent=27 // pred_check_branch
        %336 = sbr.rel (%p334) target = $region32
      $region31: #{branch_1_fun.1} parent=27 // pred_region
        %s337 = sld [smem:[#allocation3 + $0x5]]
        %p338 = scmp.gt.s32.totalorder %s27, %s337
        %s339 = scalar_select %p338, %s27, %s337
        %s340 = sld [smem:[#allocation3 + $0x6]]
        %p341 = scmp.lt.s32.totalorder %s339, %s340
        %s342 = scalar_select %p341, %s339, %s340
      $region32: #{branch_1_fun.1} parent=27 // pred_fallthru
        _
    $region28: #{branch_1_fun.1} parent=5 // pred_fallthru
      _
    %p343 = scmp.le.s32.totalorder 2, %s17
    // Predicated region
    $region33: #{branch_1_fun.1} parent=5 // pred_check
      %p344 = pneg %p343
    $region34: #{branch_1_fun.1} parent=5 // pred_check_branch
      %346 = sbr.rel (%p344) target = $region36
    $region35: #{branch_1_fun.1} parent=5 // pred_region
      %s347 = ssub.s32 %s17, 2
      // Predicated region
      $region37: #{branch_1_fun.1} parent=35 // pred_check
        %p348 = pneg %p150
      $region38: #{branch_1_fun.1} parent=35 // pred_check_branch
        %350 = sbr.rel (%p348) target = $region40
      $region39: #{branch_1_fun.1} parent=35 // pred_region
        %s351 = sld [smem:[#allocation3 + $0x5]]
        %p352 = scmp.gt.s32.totalorder %s29, %s351
        %s353 = scalar_select %p352, %s29, %s351
        %s354 = sld [smem:[#allocation3 + $0x6]]
        %p355 = scmp.lt.s32.totalorder %s353, %s354
        %s356 = scalar_select %p355, %s353, %s354
        %p357 = scmp.lt.s32.totalorder %s28, 0
        %s358 = scalar_select %p357, %s28, 0
        %p359 = scmp.lt.s32.totalorder %s356, 1
        %s360 = scalar_select %p359, %s356, 1
        %s361 = smul.addr %s358, 2
        %s362 = sadd.s32 %s360, %s361
        %s363 = smul.addr %s362, 2
        %s364 = scalar_lea.vmem %s3, %s363
      $region40: #{branch_1_fun.1} parent=35 // pred_fallthru
        _
    $region36: #{branch_1_fun.1} parent=5 // pred_fallthru
      _
  $region6: #{branch_1_fun.1} parent=0 // loop_footer
    %s21 = sadd.s32 1, %s17
  $region7: #{branch_1_fun.1} parent=0 // loop_footer_branch
    %16 = sbr.rel target = $region3
  $region8: #{branch_1_fun.1} parent=0 // loop_exit
    _

</llo_original>
